<compile_context>
chip_gen: v7x
topology: tpu7x:2x2x1
jax: 0.10.0
libtpu: 0.0.40
codegen_flags: <defaults>
</compile_context>

<pallas_src>
import jax
import jax.numpy as jnp
from jax.experimental import pallas as pl
from jax.experimental.pallas import tpu as pltpu


def _attention_net_kernel(x_ref, w1_ref, b1_ref, w2_ref, b2_ref, o_ref):
    # Hidden layer: (TILE_B, IN) @ (IN, HID) on the MXU, f32 accumulation.
    h = jnp.dot(x_ref[...], w1_ref[...], preferred_element_type=jnp.float32)
    h = jnp.maximum(h + b1_ref[...], 0.0)                    # bias + ReLU (f32, VPU)

    # Output layer: cast h to the weight dtype so the bf16 MXU fast path is
    # used when the wrapper provides bf16 weights; accumulate in f32.
    y = jnp.dot(h.astype(w2_ref.dtype), w2_ref[...],
                preferred_element_type=jnp.float32)
    y = y + b2_ref[...]

    # Per-row min-max normalization over the feature (lane) axis.
    # NaN/Inf for a row with mx == mn matches the PyTorch reference semantics.
    mn = jnp.min(y, axis=-1, keepdims=True)                   # XLU lane reduce
    mx = jnp.max(y, axis=-1, keepdims=True)
    inv = pl.reciprocal(mx - mn, approx=True)                 # EUP (free slot)
    o_ref[...] = ((y - mn) * inv).astype(o_ref.dtype)         # VPU multiply


def attention_net_forward(x, w1, b1, w2, b2, *, tile_b=512, mxu_dtype=None):
    """Pallas implementation of AttentionNet.forward.

    x:  (B, in_feature)           float32
    w1: (n_hidden, in_feature)    (PyTorch Linear layout), b1: (n_hidden,)
    w2: (out_feature, n_hidden),                           b2: (out_feature,)
    mxu_dtype: optional dtype (e.g. jnp.bfloat16) for the matmul inputs
               (v6e / v7x fast path); accumulation and epilogue stay f32.
    returns (B, out_feature) float32
    """
    B, in_f = x.shape
    n_hidden = w1.shape[0]
    out_f = w2.shape[0]

    # Layout plumbing in the wrapper: pre-transpose weights, lift biases to 2-D
    # so they map onto (sublane, lane) VMEM tiles. Biases stay f32 (epilogue).
    w1_t = jnp.asarray(w1).T                       # (in_f, n_hidden)
    w2_t = jnp.asarray(w2).T                       # (n_hidden, out_f)
    b1_2d = jnp.asarray(b1, jnp.float32).reshape(1, n_hidden)
    b2_2d = jnp.asarray(b2, jnp.float32).reshape(1, out_f)

    if mxu_dtype is not None:
        x = x.astype(mxu_dtype)
        w1_t = w1_t.astype(mxu_dtype)
        w2_t = w2_t.astype(mxu_dtype)

    # Batch tile: multiple of 8 (sublane), clamped to the rounded-up batch so
    # a tiny B collapses to a single grid step. No wrapper-side padding: the
    # ragged last block is masked by Pallas (rows are independent).
    tile_b = max(8, int(tile_b))
    tile_b = -(-tile_b // 8) * 8
    tile_b = min(tile_b, -(-B // 8) * 8)
    grid = (pl.cdiv(B, tile_b),)

    # VMEM footprint (double-buffered x/out tiles + resident weights) is tiny
    # at these feature dims; re-derive tile_b / vmem_limit_bytes if they grow
    # (v7x: 64 MiB physical, v5e: 16 MiB default scoped limit).
    out = pl.pallas_call(
        _attention_net_kernel,
        out_shape=jax.ShapeDtypeStruct((B, out_f), jnp.float32),
        grid_spec=pltpu.PrefetchScalarGridSpec(
            num_scalar_prefetch=0,
            grid=grid,
            in_specs=[
                pl.BlockSpec((tile_b, in_f), lambda i: (i, 0)),       # x tile
                pl.BlockSpec((in_f, n_hidden), lambda i: (0, 0)),     # W1^T (resident)
                pl.BlockSpec((1, n_hidden), lambda i: (0, 0)),        # b1   (resident)
                pl.BlockSpec((n_hidden, out_f), lambda i: (0, 0)),    # W2^T (resident)
                pl.BlockSpec((1, out_f), lambda i: (0, 0)),           # b2   (resident)
            ],
            out_specs=pl.BlockSpec((tile_b, out_f), lambda i: (i, 0)),
        ),
        compiler_params=pltpu.CompilerParams(
            dimension_semantics=("parallel",),
        ),
    )(x, w1_t, b1_2d, w2_t, b2_2d)

    return out


def _reference(x, w1, b1, w2, b2):
    h = jnp.maximum(x @ w1.T + b1, 0.0)
    y = h @ w2.T + b2
    mn = jnp.min(y, axis=1, keepdims=True)
    mx = jnp.max(y, axis=1, keepdims=True)
    return (y - mn) / (mx - mn)


if __name__ == "__main__":
    key = jax.random.PRNGKey(0)
    k_x, k_w1, k_b1, k_w2, k_b2 = jax.random.split(key, 5)

    # Shapes consistent with AttentionNet(in_feature=32, n_hidden=64, out_feature=16)
    B, in_feature, n_hidden, out_feature = 16, 32, 64, 16

    x = jax.random.normal(k_x, (B, in_feature), dtype=jnp.float32)
    # PyTorch Linear layout: weight (out, in), bias (out,)
    w1 = jax.random.normal(k_w1, (n_hidden, in_feature), dtype=jnp.float32) * 0.1
    b1 = jax.random.normal(k_b1, (n_hidden,), dtype=jnp.float32) * 0.1
    w2 = jax.random.normal(k_w2, (out_feature, n_hidden), dtype=jnp.float32) * 0.1
    b2 = jax.random.normal(k_b2, (out_feature,), dtype=jnp.float32) * 0.1

    ref = _reference(x, w1, b1, w2, b2)

    # f32 MXU path (default). Tolerance reflects the approximate EUP reciprocal.
    y = jax.block_until_ready(attention_net_forward(x, w1, b1, w2, b2))
    assert y.shape == (B, out_feature), y.shape
    assert jnp.allclose(y, ref, rtol=5e-3, atol=5e-3), (
        float(jnp.max(jnp.abs(y - ref))))

    # bf16 MXU-input path (v6e / v7x fast path), f32 accumulation + f32 epilogue.
    y_bf16 = jax.block_until_ready(
        attention_net_forward(x, w1, b1, w2, b2, mxu_dtype=jnp.bfloat16))
    assert y_bf16.shape == (B, out_feature), y_bf16.shape
    assert jnp.allclose(y_bf16, ref, rtol=3e-2, atol=3e-2), (
        float(jnp.max(jnp.abs(y_bf16 - ref))))

    # Ragged batch (B % 8 != 0, B % tile_b != 0): exercises Pallas block
    # masking with no wrapper-side pad copy.
    B2 = 20
    x2 = jax.random.normal(k_x, (B2, in_feature), dtype=jnp.float32)
    y2 = jax.block_until_ready(attention_net_forward(x2, w1, b1, w2, b2))
    ref2 = _reference(x2, w1, b1, w2, b2)
    assert y2.shape == (B2, out_feature), y2.shape
    assert jnp.allclose(y2, ref2, rtol=5e-3, atol=5e-3), (
        float(jnp.max(jnp.abs(y2 - ref2))))

    print("KERNEL_OK")
</pallas_src>

<mosaic_0001>
module attributes {stable_mosaic.version = 11 : i64} {
  func.func @_attention_net_kernel(%arg0: i32, %arg1: memref<16x32xf32, #tpu.memory_space<vmem>>, %arg2: memref<32x64xf32, #tpu.memory_space<vmem>>, %arg3: memref<1x64xf32, #tpu.memory_space<vmem>>, %arg4: memref<64x16xf32, #tpu.memory_space<vmem>>, %arg5: memref<1x16xf32, #tpu.memory_space<vmem>>, %arg6: memref<16x16xf32, #tpu.memory_space<vmem>>) attributes {dimension_semantics = [#tpu.dimension_semantics<parallel>], iteration_bounds = array<i64: 1>, scalar_prefetch = 0 : i64, scratch_operands = 0 : i64, tpu.core_type = #tpu.core_type<tc>, window_params = [{transform_indices = @transform_0, window_bounds = array<i64: 16, 32>}, {pipeline_mode = #tpu.pipeline_mode<synchronous>, transform_indices = @transform_1, window_bounds = array<i64: 32, 64>}, {pipeline_mode = #tpu.pipeline_mode<synchronous>, transform_indices = @transform_2, window_bounds = array<i64: 1, 64>}, {pipeline_mode = #tpu.pipeline_mode<synchronous>, transform_indices = @transform_3, window_bounds = array<i64: 64, 16>}, {pipeline_mode = #tpu.pipeline_mode<synchronous>, transform_indices = @transform_4, window_bounds = array<i64: 1, 16>}, {transform_indices = @transform_5, window_bounds = array<i64: 16, 16>}]} {
    %c0 = arith.constant 0 : index
    %c0_0 = arith.constant 0 : index
    %0 = vector.load %arg1[%c0, %c0_0] : memref<16x32xf32, #tpu.memory_space<vmem>>, vector<16x32xf32>
    %c0_1 = arith.constant 0 : index
    %c0_2 = arith.constant 0 : index
    %1 = vector.load %arg2[%c0_1, %c0_2] : memref<32x64xf32, #tpu.memory_space<vmem>>, vector<32x64xf32>
    %cst = arith.constant dense<0.000000e+00> : vector<16x64xf32>
    %2 = tpu.matmul %0, %1, %cst {dimension_numbers = #tpu.dot_dimension_numbers<[1], [0], [0], [1], [0, 0, 1, 1], [], []>} : vector<16x32xf32>, vector<32x64xf32>, vector<16x64xf32> -> vector<16x64xf32>
    %c0_3 = arith.constant 0 : index
    %c0_4 = arith.constant 0 : index
    %3 = vector.load %arg3[%c0_3, %c0_4] : memref<1x64xf32, #tpu.memory_space<vmem>>, vector<1x64xf32>
    %4 = vector.broadcast %3 : vector<1x64xf32> to vector<16x64xf32>
    %5 = arith.addf %2, %4 : vector<16x64xf32>
    %cst_5 = arith.constant 0.000000e+00 : f32
    %6 = vector.broadcast %cst_5 : f32 to vector<16x64xf32>
    %7 = arith.maximumf %5, %6 : vector<16x64xf32>
    %c0_6 = arith.constant 0 : index
    %c0_7 = arith.constant 0 : index
    %8 = vector.load %arg4[%c0_6, %c0_7] : memref<64x16xf32, #tpu.memory_space<vmem>>, vector<64x16xf32>
    %cst_8 = arith.constant dense<0.000000e+00> : vector<16x16xf32>
    %9 = tpu.matmul %7, %8, %cst_8 {dimension_numbers = #tpu.dot_dimension_numbers<[1], [0], [0], [1], [0, 0, 1, 1], [], []>} : vector<16x64xf32>, vector<64x16xf32>, vector<16x16xf32> -> vector<16x16xf32>
    %c0_9 = arith.constant 0 : index
    %c0_10 = arith.constant 0 : index
    %10 = vector.load %arg5[%c0_9, %c0_10] : memref<1x16xf32, #tpu.memory_space<vmem>>, vector<1x16xf32>
    %11 = vector.broadcast %10 : vector<1x16xf32> to vector<16x16xf32>
    %12 = arith.addf %9, %11 : vector<16x16xf32>
    %cst_11 = arith.constant dense<0x7F800000> : vector<16xf32>
    %13 = vector.multi_reduction <minimumf>, %12, %cst_11 [1] : vector<16x16xf32> to vector<16xf32>
    %14 = vector.shape_cast %13 : vector<16xf32> to vector<16x1xf32>
    %cst_12 = arith.constant dense<0xFF800000> : vector<16xf32>
    %15 = vector.multi_reduction <maximumf>, %12, %cst_12 [1] : vector<16x16xf32> to vector<16xf32>
    %16 = vector.shape_cast %15 : vector<16xf32> to vector<16x1xf32>
    %17 = arith.subf %16, %14 : vector<16x1xf32>
    %18 = tpu.reciprocal %17 {approx = true} : vector<16x1xf32> -> vector<16x1xf32>
    %19 = vector.broadcast %14 : vector<16x1xf32> to vector<16x16xf32>
    %20 = arith.subf %12, %19 : vector<16x16xf32>
    %21 = vector.broadcast %18 : vector<16x1xf32> to vector<16x16xf32>
    %22 = arith.mulf %20, %21 : vector<16x16xf32>
    %c0_13 = arith.constant 0 : index
    %c0_14 = arith.constant 0 : index
    %23 = vector.load %arg6[%c0_13, %c0_14] : memref<16x16xf32, #tpu.memory_space<vmem>>, vector<16x16xf32>
    tpu.vector_store %arg6[%c0_13, %c0_14], %22 {strides = array<i32>} : memref<16x16xf32, #tpu.memory_space<vmem>>, vector<16x16xf32>,
    return
  }
  func.func @transform_0(%arg0: i32) -> (i32, i32) {
    %c0_i32 = arith.constant 0 : i32
    %c0_i32_0 = arith.constant 0 : i32
    return %arg0, %c0_i32 : i32, i32
  }
  func.func @transform_1(%arg0: i32) -> (i32, i32) {
    %c0_i32 = arith.constant 0 : i32
    %c0_i32_0 = arith.constant 0 : i32
    %c0_i32_1 = arith.constant 0 : i32
    return %c0_i32, %c0_i32_0 : i32, i32
  }
  func.func @transform_2(%arg0: i32) -> (i32, i32) {
    %c0_i32 = arith.constant 0 : i32
    %c0_i32_0 = arith.constant 0 : i32
    %c0_i32_1 = arith.constant 0 : i32
    return %c0_i32, %c0_i32_0 : i32, i32
  }
  func.func @transform_3(%arg0: i32) -> (i32, i32) {
    %c0_i32 = arith.constant 0 : i32
    %c0_i32_0 = arith.constant 0 : i32
    %c0_i32_1 = arith.constant 0 : i32
    return %c0_i32, %c0_i32_0 : i32, i32
  }
  func.func @transform_4(%arg0: i32) -> (i32, i32) {
    %c0_i32 = arith.constant 0 : i32
    %c0_i32_0 = arith.constant 0 : i32
    %c0_i32_1 = arith.constant 0 : i32
    return %c0_i32, %c0_i32_0 : i32, i32
  }
  func.func @transform_5(%arg0: i32) -> (i32, i32) {
    %c0_i32 = arith.constant 0 : i32
    %c0_i32_0 = arith.constant 0 : i32
    return %arg0, %c0_i32 : i32, i32
  }
}

</mosaic_0001>

<llo_original>
// kernel: tpu_custom_call.1
$region0: #{tpu_custom_call.1}
  #allocation0 [shape = 'u32[]', space=smem, size = 0x4, offset = 0x4, fixed_abs, tag = 'smem constant byte address 0x4 - core index']
  #allocation1 [shape = 'u32[144,128]{1,0:T(1,128)}', space=vmem, size = 0x12000, scoped, tag = 'internal scratch']
  %s0 = inlined_call_operand.vmem [shape: f32[16,32], index: 0, kind: input, shape index: {}]
  %s1 = inlined_call_operand.vmem [shape: f32[32,64], index: 1, kind: input, shape index: {}]
  %s2 = inlined_call_operand.vmem [shape: f32[1,64], index: 2, kind: input, shape index: {}]
  %s3 = inlined_call_operand.vmem [shape: f32[64,16], index: 3, kind: input, shape index: {}]
  %s4 = inlined_call_operand.vmem [shape: f32[1,16], index: 4, kind: input, shape index: {}]
  %s5 = inlined_call_operand.hbm [shape: f32[16,16], index: 5, kind: output, shape index: {}]
  %s6 = sld [smem:[#allocation0]]
  $region30: #{tpu_custom_call.1} parent=0
    _
  %s8 = ssub.s32 1, %s6
  %s9 = scalar_select 0, %s8, %s6
  $region1: #{tpu_custom_call.1} parent=0
    #allocation2 [shape = 'u8[8192]{0}', space=vmem, size = 0x2000, scoped, tag = 'output window, operand 0, single buffered']
    #allocation3 [shape = 's32[1]{0}', space=sflag, size = 0x4, scoped, tag = 'scoped memory for tpu_custom_call.1']
    %10 = vsyncpa [#allocation3], 0
    // Predicated region
    $region2: #{tpu_custom_call.1} parent=1 // pred_check
      _
    $region3: #{tpu_custom_call.1} parent=1 // pred_check_branch
      %12 = sbr.rel (0) target = $region5
    $region4: #{tpu_custom_call.1} parent=1 // pred_region
      _
    $region5: #{tpu_custom_call.1} parent=1 // pred_fallthru
      _
    // Predicated region
    $region6: #{tpu_custom_call.1} parent=1 // pred_check
      _
    $region7: #{tpu_custom_call.1} parent=1 // pred_check_branch
      %14 = sbr.rel (0) target = $region9
    $region8: #{tpu_custom_call.1} parent=1 // pred_region
      _
    $region9: #{tpu_custom_call.1} parent=1 // pred_fallthru
      _
    // Predicated region
    $region10: #{tpu_custom_call.1} parent=1 // pred_check
      _
    $region11: #{tpu_custom_call.1} parent=1 // pred_check_branch
      %16 = sbr.rel (0) target = $region13
    $region12: #{tpu_custom_call.1} parent=1 // pred_region
      _
    $region13: #{tpu_custom_call.1} parent=1 // pred_fallthru
      _
    // Predicated region
    $region14: #{tpu_custom_call.1} parent=1 // pred_check
      _
    $region15: #{tpu_custom_call.1} parent=1 // pred_check_branch
      %18 = sbr.rel (0) target = $region17
    $region16: #{tpu_custom_call.1} parent=1 // pred_region
      _
    $region17: #{tpu_custom_call.1} parent=1 // pred_fallthru
      _
    // Predicated region
    $region18: #{tpu_custom_call.1} parent=1 // pred_check
      _
    $region19: #{tpu_custom_call.1} parent=1 // pred_check_branch
      %20 = sbr.rel (0) target = $region21
    $region20: #{tpu_custom_call.1} parent=1 // pred_region
      _
    $region21: #{tpu_custom_call.1} parent=1 // pred_fallthru
      _
    %v21 = vld [vmem:[%s0] sm:$0xff]
    %v22 = vld [vmem:[%s0 + $0x8] sm:$0xff]
    %v23 = vld [vmem:[%s1] sm:$0xff]
    %v24 = vld [vmem:[%s1 + $0x8] sm:$0xff]
    %v25 = vld [vmem:[%s1 + $0x10] sm:$0xff]
    %v26 = vld [vmem:[%s1 + $0x18] sm:$0xff]
    %v27 = vld [vmem:[%s2] sm:$0x1]
    %v29 = vlaneseq
    %v30 = vshrl.u32 %v29, 7
    %v31 = vsub.s32 0, %v30
    %v32 = vrot.slane %v27, %v31
    %vm34 = vcmask 261120
    %v36 = vsel %vm34, %v21, 0
    %v39 = vsel %vm34, %v22, 0
    %41 = vmatprep.subr.mxu0 0.0
    %42 = vmatpush1.msra.mxu0 %v23
    %43 = vmatprep.subr.mxu0 0.0
    %44 = vmatpush1.msra.mxu0 %v24
    %45 = vmatprep.subr.mxu0 0.0
    %46 = vmatpush1.msra.mxu0 %v25
    %47 = vmatprep.subr.mxu0 0.0
    %48 = vmatpush1.msra.mxu0 %v26
    %49 = vmatprep.subr.mxu0 0.0
    %50 = vmatpush1.msra.mxu0 0.0
    %51 = vmatprep.subr.mxu0 0.0
    %52 = vmatpush1.msra.mxu0 0.0
    %53 = vmatprep.subr.mxu0 0.0
    %54 = vmatpush1.msra.mxu0 0.0
    %55 = vmatprep.subr.mxu0 0.0
    %56 = vmatpush1.msra.mxu0 0.0
    %57 = vmatprep.subr.mxu0 0.0
    %58 = vmatpush1.msra.mxu0 0.0
    %59 = vmatprep.subr.mxu0 0.0
    %60 = vmatpush1.msra.mxu0 0.0
    %61 = vmatprep.subr.mxu0 0.0
    %62 = vmatpush1.msra.mxu0 0.0
    %63 = vmatprep.subr.mxu0 0.0
    %64 = vmatpush1.msra.mxu0 0.0
    %65 = vmatprep.subr.mxu0 0.0
    %66 = vmatpush1.msra.mxu0 0.0
    %67 = vmatprep.subr.mxu0 0.0
    %68 = vmatpush1.msra.mxu0 0.0
    %69 = vmatprep.subr.mxu0 0.0
    %70 = vmatpush1.msra.mxu0 0.0
    %71 = vmatprep.subr.mxu0 0.0
    %72 = vmatpush1.msra.mxu0 0.0
    %73 = vmatprep.subr.mxu0 0.0
    %74 = vmatpush1.msra.mxu0 0.0
    %75 = vmatprep.subr.mxu0 0.0
    %76 = vmatpush1.msra.mxu0 0.0
    %77 = vmatprep.subr.mxu0 0.0
    %78 = vmatpush1.msra.mxu0 0.0
    %79 = vmatprep.subr.mxu0 0.0
    %80 = vmatpush1.msra.mxu0 0.0
    %81 = vmatprep.subr.mxu0 0.0
    %82 = vmatpush1.msra.mxu0 0.0
    %83 = vmatprep.subr.mxu0 0.0
    %84 = vmatpush1.msra.mxu0 0.0
    %85 = vmatprep.subr.mxu0 0.0
    %86 = vmatpush1.msra.mxu0 0.0
    %87 = vmatprep.subr.mxu0 0.0
    %88 = vmatpush1.msra.mxu0 0.0
    %89 = vmatprep.subr.mxu0 0.0
    %90 = vmatpush1.msra.mxu0 0.0
    %91 = vmatprep.subr.mxu0 0.0
    %92 = vmatpush1.msra.mxu0 0.0
    %93 = vmatprep.subr.mxu0 0.0
    %94 = vmatpush1.msra.mxu0 0.0
    %95 = vmatprep.subr.mxu0 0.0
    %96 = vmatpush1.msra.mxu0 0.0
    %97 = vmatprep.subr.mxu0 0.0
    %98 = vmatpush1.msra.mxu0 0.0
    %99 = vmatprep.subr.mxu0 0.0
    %100 = vmatpush1.msra.mxu0 0.0
    %101 = vmatprep.subr.mxu0 0.0
    %102 = vmatpush1.msra.mxu0 0.0
    %103 = vmatprep.subr.mxu0 0.0
    %104 = vmatpush1.msra.mxu0 0.0
    %105 = vmatprep.mubr.f32.mxu0 0.0
    %106 = vmatmul.mubr.f32.gmra.mrb[0].mxu0 %v36
    %v107 = vpop.f32.mrb[0].mxu0
    %v108 = vadd.f32 %v32, %v107
    %v109 = vpop.f32.mrb[0].mxu0
    %110 = vmatprep.mubr.f32.mxu0 0.0
    %111 = vmatmul.mubr.f32.gmra.mrb[0].mxu0 %v39
    %v112 = vpop.f32.mrb[0].mxu0
    %v113 = vadd.f32 %v32, %v112
    %v114 = vpop.f32.mrb[0].mxu0
    %115 = vdwg.mxu0
    %v116 = vmax.f32 %v108, 0.0
    %v117 = vmax.f32 %v113, 0.0
    %v118 = vld [vmem:[%s3] sm:$0xff]
    %v119 = vld [vmem:[%s3 + $0x8] sm:$0xff]
    %v120 = vld [vmem:[%s3 + $0x10] sm:$0xff]
    %v121 = vld [vmem:[%s3 + $0x18] sm:$0xff]
    %v122 = vld [vmem:[%s3 + $0x20] sm:$0xff]
    %v123 = vld [vmem:[%s3 + $0x28] sm:$0xff]
    %v124 = vld [vmem:[%s3 + $0x30] sm:$0xff]
    %v125 = vld [vmem:[%s3 + $0x38] sm:$0xff]
    %v126 = vld [vmem:[%s4] sm:$0x1]
    %v128 = vlaneseq
    %v129 = vshrl.u32 %v128, 7
    %v130 = vsub.s32 0, %v129
    %v131 = vrot.slane %v126, %v130
    %vm133 = vcmask 523264
    %v135 = vsel %vm133, %v116, 0
    %v138 = vsel %vm133, %v117, 0
    %140 = vmatprep.subr.mxu0 0.0
    %141 = vmatpush1.msra.mxu0 %v118
    %142 = vmatprep.subr.mxu0 0.0
    %143 = vmatpush1.msra.mxu0 %v119
    %144 = vmatprep.subr.mxu0 0.0
    %145 = vmatpush1.msra.mxu0 %v120
    %146 = vmatprep.subr.mxu0 0.0
    %147 = vmatpush1.msra.mxu0 %v121
    %148 = vmatprep.subr.mxu0 0.0
    %149 = vmatpush1.msra.mxu0 %v122
    %150 = vmatprep.subr.mxu0 0.0
    %151 = vmatpush1.msra.mxu0 %v123
    %152 = vmatprep.subr.mxu0 0.0
    %153 = vmatpush1.msra.mxu0 %v124
    %154 = vmatprep.subr.mxu0 0.0
    %155 = vmatpush1.msra.mxu0 %v125
    %156 = vmatprep.subr.mxu0 0.0
    %157 = vmatpush1.msra.mxu0 0.0
    %158 = vmatprep.subr.mxu0 0.0
    %159 = vmatpush1.msra.mxu0 0.0
    %160 = vmatprep.subr.mxu0 0.0
    %161 = vmatpush1.msra.mxu0 0.0
    %162 = vmatprep.subr.mxu0 0.0
    %163 = vmatpush1.msra.mxu0 0.0
    %164 = vmatprep.subr.mxu0 0.0
    %165 = vmatpush1.msra.mxu0 0.0
    %166 = vmatprep.subr.mxu0 0.0
    %167 = vmatpush1.msra.mxu0 0.0
    %168 = vmatprep.subr.mxu0 0.0
    %169 = vmatpush1.msra.mxu0 0.0
    %170 = vmatprep.subr.mxu0 0.0
    %171 = vmatpush1.msra.mxu0 0.0
    %172 = vmatprep.subr.mxu0 0.0
    %173 = vmatpush1.msra.mxu0 0.0
    %174 = vmatprep.subr.mxu0 0.0
    %175 = vmatpush1.msra.mxu0 0.0
    %176 = vmatprep.subr.mxu0 0.0
    %177 = vmatpush1.msra.mxu0 0.0
    %178 = vmatprep.subr.mxu0 0.0
    %179 = vmatpush1.msra.mxu0 0.0
    %180 = vmatprep.subr.mxu0 0.0
    %181 = vmatpush1.msra.mxu0 0.0
    %182 = vmatprep.subr.mxu0 0.0
    %183 = vmatpush1.msra.mxu0 0.0
    %184 = vmatprep.subr.mxu0 0.0
    %185 = vmatpush1.msra.mxu0 0.0
    %186 = vmatprep.subr.mxu0 0.0
    %187 = vmatpush1.msra.mxu0 0.0
    %188 = vmatprep.subr.mxu0 0.0
    %189 = vmatpush1.msra.mxu0 0.0
    %190 = vmatprep.subr.mxu0 0.0
    %191 = vmatpush1.msra.mxu0 0.0
    %192 = vmatprep.subr.mxu0 0.0
    %193 = vmatpush1.msra.mxu0 0.0
    %194 = vmatprep.subr.mxu0 0.0
    %195 = vmatpush1.msra.mxu0 0.0
    %196 = vmatprep.subr.mxu0 0.0
    %197 = vmatpush1.msra.mxu0 0.0
    %198 = vmatprep.subr.mxu0 0.0
    %199 = vmatpush1.msra.mxu0 0.0
    %200 = vmatprep.subr.mxu0 0.0
    %201 = vmatpush1.msra.mxu0 0.0
    %202 = vmatprep.subr.mxu0 0.0
    %203 = vmatpush1.msra.mxu0 0.0
    %204 = vmatprep.mubr.f32.mxu0 0.0
    %205 = vmatmul.mubr.f32.gmra.mrb[0].mxu0 %v135
    %v206 = vpop.f32.mrb[0].mxu0
    %v207 = vadd.f32 %v131, %v206
    %v208 = vpop.f32.mrb[0].mxu0
    %209 = vmatprep.mubr.f32.mxu0 0.0
    %210 = vmatmul.mubr.f32.gmra.mrb[0].mxu0 %v138
    %v211 = vpop.f32.mrb[0].mxu0
    %v212 = vadd.f32 %v131, %v211
    %v213 = vpop.f32.mrb[0].mxu0
    %214 = vdwg.mxu0
    %vm215 = vcmask 130048
    %v216 = vsel %vm215, %v207, inf
    %217 = vmin.xlane.f32.xlu0 %v216
    %v218 = vpop.xlane.xlu0 %217
    %v219 = vsel %vm215, %v212, inf
    %220 = vmin.xlane.f32.xlu0 %v219
    %v221 = vpop.xlane.xlu0 %220
    %v222 = vsel %vm215, %v207, -inf
    %223 = vmax.xlane.f32.xlu0 %v222
    %v224 = vpop.xlane.xlu0 %223
    %v225 = vsel %vm215, %v212, -inf
    %226 = vmax.xlane.f32.xlu0 %v225
    %v227 = vpop.xlane.xlu0 %226
    %v228 = vsub.f32 %v224, %v218
    %v229 = vsub.f32 %v227, %v221
    %v230 = vrcp.pop %v228
    %v231 = vrcp.pop %v229
    %v232 = vsub.f32 %v207, %v218
    %v233 = vsub.f32 %v212, %v221
    %v234 = vmul.f32 %v232, %v230
    %v235 = vmul.f32 %v233, %v231
    %236 = vst.msk [vmem:[#allocation2] sm:$0xff] %vm215, %v234
    %237 = vst.msk [vmem:[#allocation2 + $0x8] sm:$0xff] %vm215, %v235
    // Predicated region
    $region22: #{tpu_custom_call.1} parent=1 // pred_check
      _
    $region23: #{tpu_custom_call.1} parent=1 // pred_check_branch
      %239 = sbr.rel (0) target = $region25
    $region24: #{tpu_custom_call.1} parent=1 // pred_region
      %s241 = ssub.s32 256, 256
      %242 = vsyncadd [#allocation3], %s241
      %s243 = sshll.u32 [#allocation2], 4
      %s244 = int_to_ptr.vmem [resolvable:$true] %s243
      %249 = dma.vmem_to_hbm [thread:$0]  %s244, 256, %s5, [#allocation3], 128, 128, 8
    $region25: #{tpu_custom_call.1} parent=1 // pred_fallthru
      _
    // Predicated region
    $region26: #{tpu_custom_call.1} parent=1 // pred_check
      _
    $region27: #{tpu_custom_call.1} parent=1 // pred_check_branch
      %251 = sbr.rel (0) target = $region29
    $region28: #{tpu_custom_call.1} parent=1 // pred_region
      %252 = dma.done [#allocation3], 256
    $region29: #{tpu_custom_call.1} parent=1 // pred_fallthru
      _
    %253 = vsyncpa [#allocation3], 1

</llo_original>
